<compile_context>
chip_gen: v7x
topology: tpu7x:2x2x1
jax: 0.10.0
libtpu: 0.0.40
codegen_flags: <defaults>
</compile_context>

<pallas_src>
import jax
import jax.numpy as jnp
from jax.experimental import pallas as pl
from jax.experimental.pallas import tpu as pltpu


def _drop_path_kernel(scale_ref, x_ref, o_ref):
    # scale_ref: (TB, 1) f32; x_ref / o_ref: (TB, TF).
    # Multiply in f32 (costs nothing: HBM-roofline bound), cast back.
    o_ref[...] = (x_ref[...].astype(jnp.float32) * scale_ref[...]).astype(o_ref.dtype)


def _drop_path_add_kernel(scale_ref, x_ref, res_ref, o_ref):
    # Fused residual add: out = residual + x * scale.
    o_ref[...] = (res_ref[...].astype(jnp.float32)
                  + x_ref[...].astype(jnp.float32) * scale_ref[...]
                  ).astype(o_ref.dtype)


def _sublane(itemsize: int) -> int:
    # Sublane packing factor per dtype width (f32 -> 8, bf16 -> 16, int8 -> 32).
    return {4: 8, 2: 16, 1: 32}.get(itemsize, 8)


def _vmem_capacity_bytes() -> int:
    try:
        return int(pltpu.get_tpu_info().vmem_capacity_bytes)
    except Exception:
        return 64 << 20  # conservative default (v7x per-TC VMEM)


def drop_path(x: jax.Array, drop_prob: float, key: jax.Array,
              training: bool = True, *,
              residual: jax.Array | None = None,
              target_block_bytes: int | None = None,
              min_grid_steps: int = 8,
              min_pallas_bytes: int = 1 << 20) -> jax.Array:
    """Pallas implementation of DropPath.forward (per-sample stochastic depth).

    If `residual` is given, returns `residual + drop_path(x)` fused in one pass.
    """
    if residual is not None and residual.shape != x.shape:
        raise ValueError("residual must match x.shape")

    def _finish(y):
        return y if residual is None else residual + y

    if drop_prob == 0.0 or not training:
        return _finish(x)

    keep_prob = 1.0 - drop_prob
    if keep_prob <= 0.0:
        # torch's raw expression (x.div(0) * 0) would be NaN; dropping every
        # path is semantically all-zeros, so guard it explicitly.
        return _finish(jnp.zeros_like(x))

    orig_shape = x.shape
    B = orig_shape[0]
    F = 1
    for d in orig_shape[1:]:
        F *= d

    # Per-sample scale, computed once in plain JAX (B scalars; trivially cheap).
    rand = jax.random.uniform(key, (B,), dtype=jnp.float32)
    scale = (jnp.floor(keep_prob + rand) * (1.0 / keep_prob)).reshape(B, 1)

    itemsize = jnp.dtype(x.dtype).itemsize
    total_bytes = B * F * itemsize

    # Tiny shapes / narrow rows: XLA's fused elementwise is at least as fast
    # there and avoids the fixed kernel-launch / masked-store costs.
    if F < 128 or total_bytes < min_pallas_bytes:
        bshape = (B,) + (1,) * (len(orig_shape) - 1)
        y = (x.astype(jnp.float32) * scale.reshape(bshape)).astype(x.dtype)
        return _finish(y)

    x2 = x.reshape(B, F)
    res2 = None if residual is None else residual.reshape(B, F)
    n_streams = 2 if residual is None else 3      # streamed (TB, TF) arrays

    sub = _sublane(itemsize)
    vmem_cap = _vmem_capacity_bytes()

    # Block-byte budget: large enough to amortize ~0.35 us/grid-step overhead,
    # small enough that the double-buffered working set fits every generation.
    cap = max(1 << 20, vmem_cap // (4 * n_streams))
    if target_block_bytes is None:
        target_block_bytes = min(16 << 20, cap)
    else:
        target_block_bytes = max(1, min(target_block_bytes, cap))

    # Lane (last-dim) tile first: prefer the full row (contiguous DMA, widest
    # unmasked stores); otherwise largest multiple of 128 the budget allows at
    # the minimum sublane height.
    max_tf = max(128, target_block_bytes // (sub * itemsize))
    if F <= max_tf:
        TF = F
    else:
        TF = max(128, (max_tf // 128) * 128)

    # Sublane (batch) tile: multiple of the sublane pack, ~target_block_bytes.
    tb = max(sub, (target_block_bytes // (TF * itemsize) // sub) * sub)
    TB = B if tb >= B else tb

    # Degenerate-grid guard: a (1, 1) grid runs un-pipelined on one TensorCore
    # (v7x has two); force several grid steps when the shape allows it.
    bsteps, fsteps = pl.cdiv(B, TB), pl.cdiv(F, TF)
    if bsteps * fsteps < min_grid_steps:
        need_b = pl.cdiv(min_grid_steps, fsteps)
        if B >= need_b * sub:
            TB = max(sub, ((B // need_b) // sub) * sub)
            bsteps = pl.cdiv(B, TB)
        if bsteps * fsteps < min_grid_steps:
            need_f = pl.cdiv(min_grid_steps, bsteps)
            if F >= need_f * 128:
                TF = max(128, ((F // need_f) // 128) * 128)
                fsteps = pl.cdiv(F, TF)
    grid = (bsteps, fsteps)

    block_bytes = TB * TF * itemsize
    vmem_limit = int(min(max(2 * n_streams * block_bytes + (2 << 20), 16 << 20),
                         (3 * vmem_cap) // 4))

    data_spec = pl.BlockSpec((TB, TF), lambda i, j: (i, j))
    scale_spec = pl.BlockSpec((TB, 1), lambda i, j: (i, 0))  # i-only: no re-DMA over j

    if residual is None:
        kernel = _drop_path_kernel
        in_specs = [scale_spec, data_spec]
        args = (scale, x2)
    else:
        kernel = _drop_path_add_kernel
        in_specs = [scale_spec, data_spec, data_spec]
        args = (scale, x2, res2)

    out = pl.pallas_call(
        kernel,
        out_shape=jax.ShapeDtypeStruct((B, F), x.dtype),
        grid=grid,
        in_specs=in_specs,
        out_specs=data_spec,
        compiler_params=pltpu.CompilerParams(
            dimension_semantics=("parallel", "parallel"),
            vmem_limit_bytes=vmem_limit,
        ),
    )(*args)

    return out.reshape(orig_shape)


if __name__ == "__main__":
    key = jax.random.PRNGKey(0)
    kx, kmask, kx2, kmask2, kres = jax.random.split(key, 5)

    # Small ViT-like shape: (batch, tokens, hidden).
    B, N, D = 2, 8, 32
    x = jax.random.normal(kx, (B, N, D), dtype=jnp.float32)
    drop_prob = 0.5
    keep_prob = 1.0 - drop_prob
    u = jax.random.uniform(kmask, (B,), dtype=jnp.float32)
    scale_ref = (jnp.floor(keep_prob + u) * (1.0 / keep_prob)).reshape(B, 1, 1)

    # Basic kernel path (min_pallas_bytes=0 forces the Pallas path at this size).
    out = jax.block_until_ready(
        drop_path(x, drop_prob, kmask, training=True, min_pallas_bytes=0))
    ref = x * scale_ref
    assert jnp.allclose(out, ref, atol=1e-6), "mismatch (default tiling)"

    # Fused residual path: out = res + drop_path(x).
    res = jax.random.normal(kres, (B, N, D), dtype=jnp.float32)
    out_f = jax.block_until_ready(
        drop_path(x, drop_prob, kmask, training=True, residual=res,
                  min_pallas_bytes=0))
    assert jnp.allclose(out_f, res + ref, atol=1e-6), "mismatch (fused residual)"

    # Multi-block tiling path (tiny tiles forced via kwargs), uneven batch so
    # edge-block masking is covered.
    B2, N2, D2 = 10, 8, 32
    x2 = jax.random.normal(kx2, (B2, N2, D2), dtype=jnp.float32)
    out2 = jax.block_until_ready(
        drop_path(x2, 0.25, kmask2, training=True,
                  target_block_bytes=4096, min_pallas_bytes=0))
    u2 = jax.random.uniform(kmask2, (B2,), dtype=jnp.float32)
    ref2 = x2 * (jnp.floor(0.75 + u2) * (1.0 / 0.75)).reshape(B2, 1, 1)
    assert jnp.allclose(out2, ref2, atol=1e-6), "mismatch (multi-block tiling)"

    # bf16 path: multiply happens in f32 inside the kernel, result cast to bf16.
    xb = x.astype(jnp.bfloat16)
    outb = jax.block_until_ready(
        drop_path(xb, drop_prob, kmask, training=True, min_pallas_bytes=0))
    refb = (xb.astype(jnp.float32) * scale_ref).astype(jnp.bfloat16)
    assert jnp.allclose(outb.astype(jnp.float32), refb.astype(jnp.float32),
                        atol=1e-3), "mismatch (bf16)"

    # Eval / drop_prob == 0: identity.  drop_prob == 1: all paths dropped.
    assert jnp.array_equal(drop_path(x, drop_prob, kmask, training=False), x)
    assert jnp.array_equal(drop_path(x, 0.0, kmask, training=True), x)
    assert jnp.array_equal(
        jax.block_until_ready(drop_path(x, 1.0, kmask, training=True)),
        jnp.zeros_like(x))

    print("KERNEL_OK")
</pallas_src>

<mosaic_0001>
module attributes {stable_mosaic.version = 11 : i64} {
  func.func @_drop_path_kernel(%arg0: i32, %arg1: i32, %arg2: memref<2x1xf32, #tpu.memory_space<vmem>>, %arg3: memref<2x256xf32, #tpu.memory_space<vmem>>, %arg4: memref<2x256xf32, #tpu.memory_space<vmem>>) attributes {dimension_semantics = [#tpu.dimension_semantics<parallel>, #tpu.dimension_semantics<parallel>], iteration_bounds = array<i64: 1, 1>, scalar_prefetch = 0 : i64, scratch_operands = 0 : i64, tpu.core_type = #tpu.core_type<tc>, window_params = [{transform_indices = @transform_0, window_bounds = array<i64: 2, 1>}, {transform_indices = @transform_1, window_bounds = array<i64: 2, 256>}, {transform_indices = @transform_2, window_bounds = array<i64: 2, 256>}]} {
    %c0 = arith.constant 0 : index
    %c0_0 = arith.constant 0 : index
    %0 = vector.load %arg3[%c0, %c0_0] : memref<2x256xf32, #tpu.memory_space<vmem>>, vector<2x256xf32>
    %c0_1 = arith.constant 0 : index
    %c0_2 = arith.constant 0 : index
    %1 = vector.load %arg2[%c0_1, %c0_2] : memref<2x1xf32, #tpu.memory_space<vmem>>, vector<2x1xf32>
    %2 = vector.broadcast %1 : vector<2x1xf32> to vector<2x256xf32>
    %3 = arith.mulf %0, %2 : vector<2x256xf32>
    %c0_3 = arith.constant 0 : index
    %c0_4 = arith.constant 0 : index
    %4 = vector.load %arg4[%c0_3, %c0_4] : memref<2x256xf32, #tpu.memory_space<vmem>>, vector<2x256xf32>
    tpu.vector_store %arg4[%c0_3, %c0_4], %3 {strides = array<i32>} : memref<2x256xf32, #tpu.memory_space<vmem>>, vector<2x256xf32>,
    return
  }
  func.func @transform_0(%arg0: i32, %arg1: i32) -> (i32, i32) {
    %c0_i32 = arith.constant 0 : i32
    %c0_i32_0 = arith.constant 0 : i32
    return %arg0, %c0_i32 : i32, i32
  }
  func.func @transform_1(%arg0: i32, %arg1: i32) -> (i32, i32) {
    %c0_i32 = arith.constant 0 : i32
    return %arg0, %arg1 : i32, i32
  }
  func.func @transform_2(%arg0: i32, %arg1: i32) -> (i32, i32) {
    %c0_i32 = arith.constant 0 : i32
    return %arg0, %arg1 : i32, i32
  }
}

</mosaic_0001>

<llo_original>
// kernel: tpu_custom_call.1
$region0: #{tpu_custom_call.1}
  #allocation0 [shape = 'u32[]', space=smem, size = 0x4, offset = 0x4, fixed_abs, tag = 'smem constant byte address 0x4 - core index']
  #allocation1 [shape = 'u32[144,128]{1,0:T(1,128)}', space=vmem, size = 0x12000, scoped, tag = 'internal scratch']
  %s0 = inlined_call_operand.vmem [shape: f32[2,1], index: 0, kind: input, shape index: {}]
  %s1 = inlined_call_operand.vmem [shape: f32[2,256], index: 1, kind: input, shape index: {}]
  %s2 = inlined_call_operand.hbm [shape: f32[2,256], index: 2, kind: output, shape index: {}]
  %s3 = sld [smem:[#allocation0]]
  $region18: #{tpu_custom_call.1} parent=0
    _
  %s5 = ssub.s32 1, %s3
  %s6 = scalar_select 0, %s5, %s3
  $region1: #{tpu_custom_call.1} parent=0
    #allocation2 [shape = 'u8[2048]{0}', space=vmem, size = 0x800, scoped, tag = 'output window, operand 0, single buffered']
    #allocation3 [shape = 's32[1]{0}', space=sflag, size = 0x4, scoped, tag = 'scoped memory for tpu_custom_call.1']
    %7 = vsyncpa [#allocation3], 0
    // Predicated region
    $region2: #{tpu_custom_call.1} parent=1 // pred_check
      _
    $region3: #{tpu_custom_call.1} parent=1 // pred_check_branch
      %9 = sbr.rel (0) target = $region5
    $region4: #{tpu_custom_call.1} parent=1 // pred_region
      _
    $region5: #{tpu_custom_call.1} parent=1 // pred_fallthru
      _
    // Predicated region
    $region6: #{tpu_custom_call.1} parent=1 // pred_check
      _
    $region7: #{tpu_custom_call.1} parent=1 // pred_check_branch
      %11 = sbr.rel (0) target = $region9
    $region8: #{tpu_custom_call.1} parent=1 // pred_region
      _
    $region9: #{tpu_custom_call.1} parent=1 // pred_fallthru
      _
    %v12 = vld [vmem:[%s1] sm:$0xf]
    %v13 = vld [vmem:[%s0] sm:$0x3]
    %15 = vset.pattern.permute.xlu0 0
    %16 = vperm.xlu0 %15, %v13
    %v17 = vpop.permute.xlu0 %16
    %v19 = vunpack.c.l.s4 269488144
    %v20 = vunpack.c.0.s8 %v19
    %v21 = vlaneseq
    %v22 = vshrl.u32 %v21, 7
    %v23 = vsub.s32 %v20, %v22
    %v24 = vrot.slane %v17, %v23
    %v26 = vmul.f32 %v12, %v24
    %27 = vst [vmem:[#allocation2] sm:$0xf] %v26
    // Predicated region
    $region10: #{tpu_custom_call.1} parent=1 // pred_check
      _
    $region11: #{tpu_custom_call.1} parent=1 // pred_check_branch
      %29 = sbr.rel (0) target = $region13
    $region12: #{tpu_custom_call.1} parent=1 // pred_region
      %s31 = ssub.s32 64, 64
      %32 = vsyncadd [#allocation3], %s31
      %s34 = sshll.u32 [#allocation2], 4
      %s35 = int_to_ptr.vmem [resolvable:$true] %s34
      %37 = dma.vmem_to_hbm [thread:$0]  %s35, 64, %s2, [#allocation3]
    $region13: #{tpu_custom_call.1} parent=1 // pred_fallthru
      _
    // Predicated region
    $region14: #{tpu_custom_call.1} parent=1 // pred_check
      _
    $region15: #{tpu_custom_call.1} parent=1 // pred_check_branch
      %39 = sbr.rel (0) target = $region17
    $region16: #{tpu_custom_call.1} parent=1 // pred_region
      %40 = dma.done [#allocation3], 64
    $region17: #{tpu_custom_call.1} parent=1 // pred_fallthru
      _
    %41 = vsyncpa [#allocation3], 1

</llo_original>
